<compile_context>
chip_gen: v7x
topology: tpu7x:2x2x1
jax: 0.10.0
libtpu: 0.0.40
codegen_flags: <defaults>
</compile_context>

<pallas_src>
import jax
import jax.numpy as jnp
from jax import lax
from jax.experimental import pallas as pl
from jax.experimental.pallas import tpu as pltpu


def _ceil_to(x, m):
    return ((x + m - 1) // m) * m


def _vmem_budget_bytes():
    """Per-generation VMEM budget with headroom for Mosaic internal scratch."""
    try:
        cap = int(pltpu.get_tpu_info().vmem_capacity_bytes)
    except Exception:
        cap = 64 << 20          # conservative (v7x-sized) fallback
    return int(cap * 0.85)      # ~109 MiB on v5e/v6e, ~54 MiB on v7x


def _pick_tile_rows(n, d_s, d_t, s_isz, t_isz, vmem_budget, max_tile_rows):
    """Adaptive row-tile size.

    Returns None when the three f32 Gram accumulators alone do not fit the
    VMEM budget (caller falls back to plain JAX).
    """
    row_s = _ceil_to(d_s, 128) * s_isz
    row_t = _ceil_to(d_t, 128) * t_isz
    # VMEM-resident fixed cost: f32 Gram / colsum output blocks (assume 2 bufs).
    fixed = 2 * 4 * (
        _ceil_to(d_s, 8) * _ceil_to(d_s, 128)
        + _ceil_to(d_s, 8) * _ceil_to(d_t, 128)
        + _ceil_to(d_t, 8) * _ceil_to(d_t, 128)
        + 8 * _ceil_to(d_s, 128)
        + 8 * _ceil_to(d_t, 128))
    avail = vmem_budget - fixed - (4 << 20)     # margin for internal scratch
    if avail <= 0:
        return None
    cap = avail // (2 * (row_s + row_t))        # double-buffered S+T tiles
    if cap < 8:
        return None
    # Stream >= ~4 MiB per input per step; cap at 8192 rows.
    want = max((4 << 20) // row_s, (4 << 20) // row_t, 256)
    want = min(want, 8192)
    tile = min(cap, want)
    if max_tile_rows is not None:
        tile = min(tile, max_tile_rows)
    if tile >= n:
        return n                                # full-extent block: always legal
    gran = 256 if tile >= 256 else 8            # MXU-friendly granularity
    tile = max((tile // gran) * gran, 8)
    return tile


def _make_cka_kernel(n_rows, tile_n, tiles_per_split, d_s, d_t):
    """Kernel body with all static params closed over."""
    dn = (((0,), (0,)), ((), ()))   # contract dim 0 of both operands -> X^T Y
    full_tiles = n_rows // tile_n
    has_partial = (n_rows % tile_n) != 0

    def kernel(s_ref, t_ref, ss_ref, st_ref, tt_ref, cs_ref, ct_ref):
        c = pl.program_id(0)          # row-range split (megacore parallel)
        i = pl.program_id(1)          # row tile within the split (reduction)
        g = c * tiles_per_split + i   # global row-tile index

        @pl.when(i == 0)
        def _init():
            ss_ref[...] = jnp.zeros_like(ss_ref)
            st_ref[...] = jnp.zeros_like(st_ref)
            tt_ref[...] = jnp.zeros_like(tt_ref)
            cs_ref[...] = jnp.zeros_like(cs_ref)
            ct_ref[...] = jnp.zeros_like(ct_ref)

        def accumulate(s, t):
            # Raw Gram accumulation on the MXU (native-dtype operands, f32
            # accumulation), contracting dim 0 -> no materialized transpose.
            if s.dtype != t.dtype:
                cdt = jnp.promote_types(s.dtype, t.dtype)
                s_x, t_x = s.astype(cdt), t.astype(cdt)   # cast in VMEM (free)
            else:
                s_x, t_x = s, t
            ss_ref[...] += lax.dot_general(
                s, s, dn, preferred_element_type=jnp.float32)
            st_ref[...] += lax.dot_general(
                s_x, t_x, dn, preferred_element_type=jnp.float32)
            tt_ref[...] += lax.dot_general(
                t, t, dn, preferred_element_type=jnp.float32)
            # Column sums (f32) for the rank-1 centering correction.
            cs_ref[...] += jnp.sum(s.astype(jnp.float32), axis=0, keepdims=True)
            ct_ref[...] += jnp.sum(t.astype(jnp.float32), axis=0, keepdims=True)

        # Steady state: full tiles, no mask -> pure DMA + MXU.
        @pl.when(g < full_tiles)
        def _steady():
            accumulate(s_ref[...], t_ref[...])

        if has_partial:
            # Only the single partial tile pays for the row mask; filler tiles
            # from the split rounding (g > full_tiles) are skipped entirely.
            @pl.when(g == full_tiles)
            def _tail():
                row = lax.broadcasted_iota(jnp.int32, (tile_n, 1), 0) + g * tile_n
                valid = row < n_rows
                s_full = s_ref[...]
                t_full = t_ref[...]
                s = jnp.where(valid, s_full, 0).astype(s_full.dtype)
                t = jnp.where(valid, t_full, 0).astype(t_full.dtype)
                accumulate(s, t)

    return kernel


def cka_loss(SH, TH, eps=1e-8, max_tile_rows=None):
    """SH: (..., dS), TH: (..., dT). Returns scalar float32 CKA loss."""
    d_s = SH.shape[-1]
    d_t = TH.shape[-1]
    s2 = SH.reshape(-1, d_s)
    t2 = TH.reshape(-1, d_t)
    n = s2.shape[0]
    assert t2.shape[0] == n, "SH and TH must have the same number of rows"

    # Stream each input in its own native dtype (no host-side promotion ->
    # no doubled HBM traffic when one operand is bf16 and the other f32).
    if s2.dtype == jnp.float64:
        s2 = s2.astype(jnp.float32)
    if t2.dtype == jnp.float64:
        t2 = t2.astype(jnp.float32)

    budget = _vmem_budget_bytes()
    tile_n = _pick_tile_rows(n, d_s, d_t,
                             jnp.dtype(s2.dtype).itemsize,
                             jnp.dtype(t2.dtype).itemsize,
                             budget, max_tile_rows)
    if tile_n is None:
        # TODO(synk): output-blocked Gram kernel for very large d; plain-JAX
        # f32 fallback keeps results correct (and explicit) in the meantime.
        S = s2.astype(jnp.float32)
        T = t2.astype(jnp.float32)
        S = S - jnp.mean(S, axis=0, keepdims=True)
        T = T - jnp.mean(T, axis=0, keepdims=True)
        num = jnp.sqrt(jnp.sum((S.T @ T) ** 2))
        den1 = jnp.sqrt(jnp.sum((S.T @ S) ** 2)) + eps
        den2 = jnp.sqrt(jnp.sum((T.T @ T) ** 2)) + eps
        return (1.0 - num / jnp.sqrt(den1 * den2)).astype(jnp.float32)

    num_tiles = pl.cdiv(n, tile_n)
    # Split the N reduction into two independent row ranges: the leading
    # "parallel" axis is sharded across v7x's two TensorCores; on single-core
    # generations it just runs serially with negligible overhead.
    num_splits = 2 if num_tiles >= 2 else 1
    tiles_per_split = pl.cdiv(num_tiles, num_splits)

    def in_map(c, i):
        # Clamp the (at most one) split-rounding filler step onto the last
        # valid block; its contribution is skipped inside the kernel.
        return (jnp.minimum(c * tiles_per_split + i, num_tiles - 1), 0)

    kernel = _make_cka_kernel(n, tile_n, tiles_per_split, d_s, d_t)

    out_shapes = (
        jax.ShapeDtypeStruct((num_splits, d_s, d_s), jnp.float32),
        jax.ShapeDtypeStruct((num_splits, d_s, d_t), jnp.float32),
        jax.ShapeDtypeStruct((num_splits, d_t, d_t), jnp.float32),
        jax.ShapeDtypeStruct((num_splits, 1, d_s), jnp.float32),
        jax.ShapeDtypeStruct((num_splits, 1, d_t), jnp.float32),
    )
    out_specs = (
        pl.BlockSpec((None, d_s, d_s), lambda c, i: (c, 0, 0)),
        pl.BlockSpec((None, d_s, d_t), lambda c, i: (c, 0, 0)),
        pl.BlockSpec((None, d_t, d_t), lambda c, i: (c, 0, 0)),
        pl.BlockSpec((None, 1, d_s), lambda c, i: (c, 0, 0)),
        pl.BlockSpec((None, 1, d_t), lambda c, i: (c, 0, 0)),
    )

    ss_p, st_p, tt_p, cs_p, ct_p = pl.pallas_call(
        kernel,
        out_shape=out_shapes,
        grid_spec=pltpu.PrefetchScalarGridSpec(
            num_scalar_prefetch=0,
            grid=(num_splits, tiles_per_split),
            in_specs=[
                pl.BlockSpec((tile_n, d_s), in_map),
                pl.BlockSpec((tile_n, d_t), in_map),
            ],
            out_specs=out_specs,
        ),
        compiler_params=pltpu.CompilerParams(
            dimension_semantics=("parallel", "arbitrary"),
            vmem_limit_bytes=budget,
        ),
    )(s2, t2)

    # Tiny (d x d) finalize in plain XLA: sum per-split partials, fold the
    # column centering in as a rank-1 correction, take Frobenius norms.
    ss = jnp.sum(ss_p, axis=0)
    st = jnp.sum(st_p, axis=0)
    tt = jnp.sum(tt_p, axis=0)
    cs = jnp.sum(cs_p, axis=0)   # (1, d_s)
    ct = jnp.sum(ct_p, axis=0)   # (1, d_t)
    inv_n = 1.0 / float(n)
    ss = ss - (cs.T @ cs) * inv_n
    st = st - (cs.T @ ct) * inv_n
    tt = tt - (ct.T @ ct) * inv_n
    num = jnp.sqrt(jnp.sum(st * st))
    den1 = jnp.sqrt(jnp.sum(ss * ss)) + eps
    den2 = jnp.sqrt(jnp.sum(tt * tt)) + eps
    return (1.0 - num / jnp.sqrt(den1 * den2)).astype(jnp.float32)


def _cka_loss_ref(SH, TH, eps=1e-8):
    d_s = SH.shape[-1]
    d_t = TH.shape[-1]
    S = SH.reshape(-1, d_s).astype(jnp.float32)
    T = TH.reshape(-1, d_t).astype(jnp.float32)
    S = S - S.mean(0, keepdims=True)
    T = T - T.mean(0, keepdims=True)
    num = jnp.linalg.norm(S.T @ T)
    den1 = jnp.linalg.norm(S.T @ S) + eps
    den2 = jnp.linalg.norm(T.T @ T) + eps
    return 1.0 - num / jnp.sqrt(den1 * den2)


if __name__ == "__main__":
    key = jax.random.PRNGKey(0)
    k1, k2, k3, k4, k5, k6 = jax.random.split(key, 6)

    # Small demo consistent with the module: (batch, seq, hidden) KD states.
    batch, seq, dS, dT = 2, 8, 32, 64
    SH = jax.random.normal(k1, (batch, seq, dS), dtype=jnp.float32)
    TH = jax.random.normal(k2, (batch, seq, dT), dtype=jnp.float32)
    loss = jax.block_until_ready(cka_loss(SH, TH, eps=1e-8))
    ref = _cka_loss_ref(SH, TH, eps=1e-8)
    assert jnp.isfinite(loss)
    assert abs(float(loss) - float(ref)) < 1e-3, (float(loss), float(ref))

    # Multi-tile, two-split streamed path with a masked remainder tile:
    # N = 1200 rows -> 3 x 512-row tiles over 2 row-range splits, bf16 inputs
    # fed straight to the MXU.
    batch2, seq2, dS2, dT2 = 4, 300, 64, 96
    SH2 = jax.random.normal(k3, (batch2, seq2, dS2), dtype=jnp.bfloat16)
    TH2 = jax.random.normal(k4, (batch2, seq2, dT2), dtype=jnp.bfloat16)
    loss2 = jax.block_until_ready(cka_loss(SH2, TH2, eps=1e-8, max_tile_rows=512))
    ref2 = _cka_loss_ref(SH2, TH2, eps=1e-8)
    assert jnp.isfinite(loss2)
    assert abs(float(loss2) - float(ref2)) < 5e-3, (float(loss2), float(ref2))

    # Mixed-dtype streaming (bf16 student, f32 teacher), no host-side upcast;
    # N = 300 rows -> 3 x 128-row tiles with a masked remainder.
    batch3, seq3, dS3, dT3 = 2, 150, 48, 32
    SH3 = jax.random.normal(k5, (batch3, seq3, dS3), dtype=jnp.bfloat16)
    TH3 = jax.random.normal(k6, (batch3, seq3, dT3), dtype=jnp.float32)
    loss3 = jax.block_until_ready(cka_loss(SH3, TH3, eps=1e-8, max_tile_rows=128))
    ref3 = _cka_loss_ref(SH3, TH3, eps=1e-8)
    assert jnp.isfinite(loss3)
    assert abs(float(loss3) - float(ref3)) < 5e-3, (float(loss3), float(ref3))

    print("KERNEL_OK")
</pallas_src>

<mosaic_0001>
module attributes {stable_mosaic.version = 11 : i64} {
  func.func @kernel(%arg0: i32, %arg1: i32, %arg2: memref<16x32xf32, #tpu.memory_space<vmem>>, %arg3: memref<16x64xf32, #tpu.memory_space<vmem>>, %arg4: memref<1x32x32xf32, #tpu.memory_space<vmem>>, %arg5: memref<1x32x64xf32, #tpu.memory_space<vmem>>, %arg6: memref<1x64x64xf32, #tpu.memory_space<vmem>>, %arg7: memref<1x1x32xf32, #tpu.memory_space<vmem>>, %arg8: memref<1x1x64xf32, #tpu.memory_space<vmem>>) attributes {dimension_semantics = [#tpu.dimension_semantics<parallel>, #tpu.dimension_semantics<arbitrary>], iteration_bounds = array<i64: 1, 1>, scalar_prefetch = 0 : i64, scratch_operands = 0 : i64, tpu.core_type = #tpu.core_type<tc>, window_params = [{transform_indices = @transform_0, window_bounds = array<i64: 16, 32>}, {transform_indices = @transform_1, window_bounds = array<i64: 16, 64>}, {transform_indices = @transform_2, window_bounds = array<i64: 1, 32, 32>}, {transform_indices = @transform_3, window_bounds = array<i64: 1, 32, 64>}, {transform_indices = @transform_4, window_bounds = array<i64: 1, 64, 64>}, {transform_indices = @transform_5, window_bounds = array<i64: 1, 1, 32>}, {transform_indices = @transform_6, window_bounds = array<i64: 1, 1, 64>}]} {
    %c1_i32 = arith.constant 1 : i32
    %0 = arith.muli %arg0, %c1_i32 : i32
    %1 = arith.addi %0, %arg1 : i32
    %c0_i32 = arith.constant 0 : i32
    %2 = arith.cmpi eq, %arg1, %c0_i32 : i32
    %3 = arith.extui %2 : i1 to i32
    %c0_i32_0 = arith.constant 0 : i32
    %4 = arith.cmpi ne, %3, %c0_i32_0 : i32
    scf.if %4 {
      %cst = arith.constant 0.000000e+00 : f32
      %8 = vector.broadcast %cst : f32 to vector<32x32xf32>
      %c0 = arith.constant 0 : index
      %c0_3 = arith.constant 0 : index
      %c0_4 = arith.constant 0 : index
      %9 = vector.load %arg4[%c0, %c0_3, %c0_4] : memref<1x32x32xf32, #tpu.memory_space<vmem>>, vector<1x32x32xf32>
      %10 = vector.shape_cast %9 : vector<1x32x32xf32> to vector<32x32xf32>
      %11 = vector.shape_cast %8 : vector<32x32xf32> to vector<1x32x32xf32>
      tpu.vector_store %arg4[%c0, %c0_3, %c0_4], %11 {strides = array<i32>} : memref<1x32x32xf32, #tpu.memory_space<vmem>>, vector<1x32x32xf32>,
      %cst_5 = arith.constant 0.000000e+00 : f32
      %12 = vector.broadcast %cst_5 : f32 to vector<32x64xf32>
      %c0_6 = arith.constant 0 : index
      %c0_7 = arith.constant 0 : index
      %c0_8 = arith.constant 0 : index
      %13 = vector.load %arg5[%c0_6, %c0_7, %c0_8] : memref<1x32x64xf32, #tpu.memory_space<vmem>>, vector<1x32x64xf32>
      %14 = vector.shape_cast %13 : vector<1x32x64xf32> to vector<32x64xf32>
      %15 = vector.shape_cast %12 : vector<32x64xf32> to vector<1x32x64xf32>
      tpu.vector_store %arg5[%c0_6, %c0_7, %c0_8], %15 {strides = array<i32>} : memref<1x32x64xf32, #tpu.memory_space<vmem>>, vector<1x32x64xf32>,
      %cst_9 = arith.constant 0.000000e+00 : f32
      %16 = vector.broadcast %cst_9 : f32 to vector<64x64xf32>
      %c0_10 = arith.constant 0 : index
      %c0_11 = arith.constant 0 : index
      %c0_12 = arith.constant 0 : index
      %17 = vector.load %arg6[%c0_10, %c0_11, %c0_12] : memref<1x64x64xf32, #tpu.memory_space<vmem>>, vector<1x64x64xf32>
      %18 = vector.shape_cast %17 : vector<1x64x64xf32> to vector<64x64xf32>
      %19 = vector.shape_cast %16 : vector<64x64xf32> to vector<1x64x64xf32>
      tpu.vector_store %arg6[%c0_10, %c0_11, %c0_12], %19 {strides = array<i32>} : memref<1x64x64xf32, #tpu.memory_space<vmem>>, vector<1x64x64xf32>,
      %cst_13 = arith.constant 0.000000e+00 : f32
      %20 = vector.broadcast %cst_13 : f32 to vector<1x32xf32>
      %c0_14 = arith.constant 0 : index
      %c0_15 = arith.constant 0 : index
      %c0_16 = arith.constant 0 : index
      %21 = vector.load %arg7[%c0_14, %c0_15, %c0_16] : memref<1x1x32xf32, #tpu.memory_space<vmem>>, vector<1x1x32xf32>
      %22 = vector.shape_cast %21 : vector<1x1x32xf32> to vector<1x32xf32>
      %23 = vector.shape_cast %20 : vector<1x32xf32> to vector<1x1x32xf32>
      tpu.vector_store %arg7[%c0_14, %c0_15, %c0_16], %23 {strides = array<i32>} : memref<1x1x32xf32, #tpu.memory_space<vmem>>, vector<1x1x32xf32>,
      %cst_17 = arith.constant 0.000000e+00 : f32
      %24 = vector.broadcast %cst_17 : f32 to vector<1x64xf32>
      %c0_18 = arith.constant 0 : index
      %c0_19 = arith.constant 0 : index
      %c0_20 = arith.constant 0 : index
      %25 = vector.load %arg8[%c0_18, %c0_19, %c0_20] : memref<1x1x64xf32, #tpu.memory_space<vmem>>, vector<1x1x64xf32>
      %26 = vector.shape_cast %25 : vector<1x1x64xf32> to vector<1x64xf32>
      %27 = vector.shape_cast %24 : vector<1x64xf32> to vector<1x1x64xf32>
      tpu.vector_store %arg8[%c0_18, %c0_19, %c0_20], %27 {strides = array<i32>} : memref<1x1x64xf32, #tpu.memory_space<vmem>>, vector<1x1x64xf32>,
    } else {
    }
    %c1_i32_1 = arith.constant 1 : i32
    %5 = arith.cmpi slt, %1, %c1_i32_1 : i32
    %6 = arith.extui %5 : i1 to i32
    %c0_i32_2 = arith.constant 0 : i32
    %7 = arith.cmpi ne, %6, %c0_i32_2 : i32
    scf.if %7 {
      %c0 = arith.constant 0 : index
      %c0_3 = arith.constant 0 : index
      %8 = vector.load %arg2[%c0, %c0_3] : memref<16x32xf32, #tpu.memory_space<vmem>>, vector<16x32xf32>
      %c0_4 = arith.constant 0 : index
      %c0_5 = arith.constant 0 : index
      %9 = vector.load %arg3[%c0_4, %c0_5] : memref<16x64xf32, #tpu.memory_space<vmem>>, vector<16x64xf32>
      %c0_6 = arith.constant 0 : index
      %c0_7 = arith.constant 0 : index
      %c0_8 = arith.constant 0 : index
      %10 = vector.load %arg4[%c0_6, %c0_7, %c0_8] : memref<1x32x32xf32, #tpu.memory_space<vmem>>, vector<1x32x32xf32>
      %11 = vector.shape_cast %10 : vector<1x32x32xf32> to vector<32x32xf32>
      %cst = arith.constant dense<0.000000e+00> : vector<32x32xf32>
      %12 = tpu.matmul %8, %8, %cst {dimension_numbers = #tpu.dot_dimension_numbers<[0], [0], [1], [1], [0, 1, 1, 1], [], []>} : vector<16x32xf32>, vector<16x32xf32>, vector<32x32xf32> -> vector<32x32xf32>
      %13 = arith.addf %11, %12 : vector<32x32xf32>
      %c0_9 = arith.constant 0 : index
      %c0_10 = arith.constant 0 : index
      %c0_11 = arith.constant 0 : index
      %14 = vector.load %arg4[%c0_9, %c0_10, %c0_11] : memref<1x32x32xf32, #tpu.memory_space<vmem>>, vector<1x32x32xf32>
      %15 = vector.shape_cast %14 : vector<1x32x32xf32> to vector<32x32xf32>
      %16 = vector.shape_cast %13 : vector<32x32xf32> to vector<1x32x32xf32>
      tpu.vector_store %arg4[%c0_9, %c0_10, %c0_11], %16 {strides = array<i32>} : memref<1x32x32xf32, #tpu.memory_space<vmem>>, vector<1x32x32xf32>,
      %c0_12 = arith.constant 0 : index
      %c0_13 = arith.constant 0 : index
      %c0_14 = arith.constant 0 : index
      %17 = vector.load %arg5[%c0_12, %c0_13, %c0_14] : memref<1x32x64xf32, #tpu.memory_space<vmem>>, vector<1x32x64xf32>
      %18 = vector.shape_cast %17 : vector<1x32x64xf32> to vector<32x64xf32>
      %cst_15 = arith.constant dense<0.000000e+00> : vector<32x64xf32>
      %19 = tpu.matmul %8, %9, %cst_15 {dimension_numbers = #tpu.dot_dimension_numbers<[0], [0], [1], [1], [0, 1, 1, 1], [], []>} : vector<16x32xf32>, vector<16x64xf32>, vector<32x64xf32> -> vector<32x64xf32>
      %20 = arith.addf %18, %19 : vector<32x64xf32>
      %c0_16 = arith.constant 0 : index
      %c0_17 = arith.constant 0 : index
      %c0_18 = arith.constant 0 : index
      %21 = vector.load %arg5[%c0_16, %c0_17, %c0_18] : memref<1x32x64xf32, #tpu.memory_space<vmem>>, vector<1x32x64xf32>
      %22 = vector.shape_cast %21 : vector<1x32x64xf32> to vector<32x64xf32>
      %23 = vector.shape_cast %20 : vector<32x64xf32> to vector<1x32x64xf32>
      tpu.vector_store %arg5[%c0_16, %c0_17, %c0_18], %23 {strides = array<i32>} : memref<1x32x64xf32, #tpu.memory_space<vmem>>, vector<1x32x64xf32>,
      %c0_19 = arith.constant 0 : index
      %c0_20 = arith.constant 0 : index
      %c0_21 = arith.constant 0 : index
      %24 = vector.load %arg6[%c0_19, %c0_20, %c0_21] : memref<1x64x64xf32, #tpu.memory_space<vmem>>, vector<1x64x64xf32>
      %25 = vector.shape_cast %24 : vector<1x64x64xf32> to vector<64x64xf32>
      %cst_22 = arith.constant dense<0.000000e+00> : vector<64x64xf32>
      %26 = tpu.matmul %9, %9, %cst_22 {dimension_numbers = #tpu.dot_dimension_numbers<[0], [0], [1], [1], [0, 1, 1, 1], [], []>} : vector<16x64xf32>, vector<16x64xf32>, vector<64x64xf32> -> vector<64x64xf32>
      %27 = arith.addf %25, %26 : vector<64x64xf32>
      %c0_23 = arith.constant 0 : index
      %c0_24 = arith.constant 0 : index
      %c0_25 = arith.constant 0 : index
      %28 = vector.load %arg6[%c0_23, %c0_24, %c0_25] : memref<1x64x64xf32, #tpu.memory_space<vmem>>, vector<1x64x64xf32>
      %29 = vector.shape_cast %28 : vector<1x64x64xf32> to vector<64x64xf32>
      %30 = vector.shape_cast %27 : vector<64x64xf32> to vector<1x64x64xf32>
      tpu.vector_store %arg6[%c0_23, %c0_24, %c0_25], %30 {strides = array<i32>} : memref<1x64x64xf32, #tpu.memory_space<vmem>>, vector<1x64x64xf32>,
      %c0_26 = arith.constant 0 : index
      %c0_27 = arith.constant 0 : index
      %c0_28 = arith.constant 0 : index
      %31 = vector.load %arg7[%c0_26, %c0_27, %c0_28] : memref<1x1x32xf32, #tpu.memory_space<vmem>>, vector<1x1x32xf32>
      %32 = vector.shape_cast %31 : vector<1x1x32xf32> to vector<1x32xf32>
      %cst_29 = arith.constant dense<0.000000e+00> : vector<32xf32>
      %33 = vector.multi_reduction <add>, %8, %cst_29 [0] : vector<16x32xf32> to vector<32xf32>
      %34 = vector.shape_cast %33 : vector<32xf32> to vector<1x32xf32>
      %35 = arith.addf %32, %34 : vector<1x32xf32>
      %c0_30 = arith.constant 0 : index
      %c0_31 = arith.constant 0 : index
      %c0_32 = arith.constant 0 : index
      %36 = vector.load %arg7[%c0_30, %c0_31, %c0_32] : memref<1x1x32xf32, #tpu.memory_space<vmem>>, vector<1x1x32xf32>
      %37 = vector.shape_cast %36 : vector<1x1x32xf32> to vector<1x32xf32>
      %38 = vector.shape_cast %35 : vector<1x32xf32> to vector<1x1x32xf32>
      tpu.vector_store %arg7[%c0_30, %c0_31, %c0_32], %38 {strides = array<i32>} : memref<1x1x32xf32, #tpu.memory_space<vmem>>, vector<1x1x32xf32>,
      %c0_33 = arith.constant 0 : index
      %c0_34 = arith.constant 0 : index
      %c0_35 = arith.constant 0 : index
      %39 = vector.load %arg8[%c0_33, %c0_34, %c0_35] : memref<1x1x64xf32, #tpu.memory_space<vmem>>, vector<1x1x64xf32>
      %40 = vector.shape_cast %39 : vector<1x1x64xf32> to vector<1x64xf32>
      %cst_36 = arith.constant dense<0.000000e+00> : vector<64xf32>
      %41 = vector.multi_reduction <add>, %9, %cst_36 [0] : vector<16x64xf32> to vector<64xf32>
      %42 = vector.shape_cast %41 : vector<64xf32> to vector<1x64xf32>
      %43 = arith.addf %40, %42 : vector<1x64xf32>
      %c0_37 = arith.constant 0 : index
      %c0_38 = arith.constant 0 : index
      %c0_39 = arith.constant 0 : index
      %44 = vector.load %arg8[%c0_37, %c0_38, %c0_39] : memref<1x1x64xf32, #tpu.memory_space<vmem>>, vector<1x1x64xf32>
      %45 = vector.shape_cast %44 : vector<1x1x64xf32> to vector<1x64xf32>
      %46 = vector.shape_cast %43 : vector<1x64xf32> to vector<1x1x64xf32>
      tpu.vector_store %arg8[%c0_37, %c0_38, %c0_39], %46 {strides = array<i32>} : memref<1x1x64xf32, #tpu.memory_space<vmem>>, vector<1x1x64xf32>,
    } else {
    }
    return
  }
  func.func @transform_0(%arg0: i32, %arg1: i32) -> (i32, i32) {
    %c1_i32 = arith.constant 1 : i32
    %0 = arith.muli %arg0, %c1_i32 : i32
    %1 = arith.addi %0, %arg1 : i32
    %c0_i32 = arith.constant 0 : i32
    %2 = arith.minsi %1, %c0_i32 : i32
    %c0_i32_0 = arith.constant 0 : i32
    %c0_i32_1 = arith.constant 0 : i32
    return %2, %c0_i32_0 : i32, i32
  }
  func.func @transform_1(%arg0: i32, %arg1: i32) -> (i32, i32) {
    %c1_i32 = arith.constant 1 : i32
    %0 = arith.muli %arg0, %c1_i32 : i32
    %1 = arith.addi %0, %arg1 : i32
    %c0_i32 = arith.constant 0 : i32
    %2 = arith.minsi %1, %c0_i32 : i32
    %c0_i32_0 = arith.constant 0 : i32
    %c0_i32_1 = arith.constant 0 : i32
    return %2, %c0_i32_0 : i32, i32
  }
  func.func @transform_2(%arg0: i32, %arg1: i32) -> (i32, i32, i32) {
    %c0_i32 = arith.constant 0 : i32
    %c0_i32_0 = arith.constant 0 : i32
    %c0_i32_1 = arith.constant 0 : i32
    return %arg0, %c0_i32, %c0_i32_0 : i32, i32, i32
  }
  func.func @transform_3(%arg0: i32, %arg1: i32) -> (i32, i32, i32) {
    %c0_i32 = arith.constant 0 : i32
    %c0_i32_0 = arith.constant 0 : i32
    %c0_i32_1 = arith.constant 0 : i32
    return %arg0, %c0_i32, %c0_i32_0 : i32, i32, i32
  }
  func.func @transform_4(%arg0: i32, %arg1: i32) -> (i32, i32, i32) {
    %c0_i32 = arith.constant 0 : i32
    %c0_i32_0 = arith.constant 0 : i32
    %c0_i32_1 = arith.constant 0 : i32
    return %arg0, %c0_i32, %c0_i32_0 : i32, i32, i32
  }
  func.func @transform_5(%arg0: i32, %arg1: i32) -> (i32, i32, i32) {
    %c0_i32 = arith.constant 0 : i32
    %c0_i32_0 = arith.constant 0 : i32
    %c0_i32_1 = arith.constant 0 : i32
    return %arg0, %c0_i32, %c0_i32_0 : i32, i32, i32
  }
  func.func @transform_6(%arg0: i32, %arg1: i32) -> (i32, i32, i32) {
    %c0_i32 = arith.constant 0 : i32
    %c0_i32_0 = arith.constant 0 : i32
    %c0_i32_1 = arith.constant 0 : i32
    return %arg0, %c0_i32, %c0_i32_0 : i32, i32, i32
  }
}

</mosaic_0001>

<llo_original>
// kernel: tpu_custom_call.1
$region0: #{tpu_custom_call.1}
  #allocation0 [shape = 'u32[]', space=smem, size = 0x4, offset = 0x4, fixed_abs, tag = 'smem constant byte address 0x4 - core index']
  #allocation1 [shape = 'u32[144,128]{1,0:T(1,128)}', space=vmem, size = 0x12000, scoped, tag = 'internal scratch']
  %s0 = inlined_call_operand.hbm [shape: f32[16,32], index: 0, kind: input, shape index: {}]
  %s1 = inlined_call_operand.hbm [shape: f32[16,64], index: 1, kind: input, shape index: {}]
  %s2 = inlined_call_operand.hbm [shape: f32[1,32,32], index: 2, kind: output, shape index: {0}]
  %s3 = inlined_call_operand.hbm [shape: f32[1,32,64], index: 3, kind: output, shape index: {1}]
  %s4 = inlined_call_operand.hbm [shape: f32[1,64,64], index: 4, kind: output, shape index: {2}]
  %s5 = inlined_call_operand.hbm [shape: f32[1,1,32], index: 5, kind: output, shape index: {3}]
  %s6 = inlined_call_operand.hbm [shape: f32[1,1,64], index: 6, kind: output, shape index: {4}]
  %7 = xla_tuple %s2, %s3, %s4, %s5, %s6
  %s8 = sld [smem:[#allocation0]]
  $region66: #{tpu_custom_call.1} parent=0
    _
  %s10 = ssub.s32 1, %s8
  %s11 = scalar_select 0, %s10, %s8
  $region1: #{tpu_custom_call.1} parent=0
    #allocation2 [shape = 'u8[8192]{0}', space=vmem, size = 0x2000, scoped, tag = 'input window, operand 0, single buffered']
    #allocation3 [shape = 's32[1]{0}', space=sflag, size = 0x4, scoped, tag = 'scoped memory for tpu_custom_call.1']
    #allocation4 [shape = 's32[1]{0}', space=sflag, size = 0x4, scoped, tag = 'scoped memory for tpu_custom_call.1']
    #allocation5 [shape = 'u8[8192]{0}', space=vmem, size = 0x2000, scoped, tag = 'input window, operand 1, single buffered']
    #allocation6 [shape = 's32[1]{0}', space=sflag, size = 0x4, scoped, tag = 'scoped memory for tpu_custom_call.1']
    #allocation7 [shape = 'u8[16384]{0}', space=vmem, size = 0x4000, scoped, tag = 'output window, operand 0, single buffered']
    #allocation8 [shape = 'u8[16384]{0}', space=vmem, size = 0x4000, scoped, tag = 'output window, operand 1, single buffered']
    #allocation9 [shape = 's32[1]{0}', space=sflag, size = 0x4, scoped, tag = 'scoped memory for tpu_custom_call.1']
    #allocation10 [shape = 'u8[32768]{0}', space=vmem, size = 0x8000, scoped, tag = 'output window, operand 2, single buffered']
    #allocation11 [shape = 'u8[512]{0}', space=vmem, size = 0x400, scoped, tag = 'output window, operand 3, single buffered']
    #allocation12 [shape = 's32[1]{0}', space=sflag, size = 0x4, scoped, tag = 'scoped memory for tpu_custom_call.1']
    #allocation13 [shape = 'u8[512]{0}', space=vmem, size = 0x400, scoped, tag = 'output window, operand 4, single buffered']
    %12 = vsyncpa [#allocation3], 0
    %13 = vsyncpa [#allocation6], 0
    %14 = vsyncpa [#allocation4], 0
    %15 = vsyncpa [#allocation9], 0
    %16 = vsyncpa [#allocation12], 0
    // Predicated region
    $region2: #{tpu_custom_call.1} parent=1 // pred_check
      _
    $region3: #{tpu_custom_call.1} parent=1 // pred_check_branch
      %18 = sbr.rel (0) target = $region5
    $region4: #{tpu_custom_call.1} parent=1 // pred_region
      %s19 = sadd.s32 0, 0
      %p20 = scmp.lt.s32.totalorder %s19, 0
      %s21 = scalar_select %p20, %s19, 0
      %s22 = smul.u32 2, %s21
      %s24 = ssub.s32 256, 256
      %25 = vsyncadd [#allocation3], %s24
      %s26 = smul.addr %s22, 128
      %s27 = scalar_lea.hbm %s0, %s26
      %s28 = sshll.u32 [#allocation2], 4
      %s29 = int_to_ptr.vmem [resolvable:$true] %s28
      %34 = dma.hbm_to_vmem [thread:$0]  %s27, 256, %s29, [#allocation3], 128, 128, 8
    $region5: #{tpu_custom_call.1} parent=1 // pred_fallthru
      _
    // Predicated region
    $region6: #{tpu_custom_call.1} parent=1 // pred_check
      _
    $region7: #{tpu_custom_call.1} parent=1 // pred_check_branch
      %36 = sbr.rel (0) target = $region9
    $region8: #{tpu_custom_call.1} parent=1 // pred_region
      %s37 = sadd.s32 0, 0
      %p38 = scmp.lt.s32.totalorder %s37, 0
      %s39 = scalar_select %p38, %s37, 0
      %s40 = smul.u32 2, %s39
      %s42 = ssub.s32 256, 256
      %43 = vsyncadd [#allocation6], %s42
      %s44 = smul.addr %s40, 128
      %s45 = scalar_lea.hbm %s1, %s44
      %s46 = sshll.u32 [#allocation5], 4
      %s47 = int_to_ptr.vmem [resolvable:$true] %s46
      %52 = dma.hbm_to_vmem [thread:$0]  %s45, 256, %s47, [#allocation6], 128, 128, 8
    $region9: #{tpu_custom_call.1} parent=1 // pred_fallthru
      _
    // Predicated region
    $region10: #{tpu_custom_call.1} parent=1 // pred_check
      _
    $region11: #{tpu_custom_call.1} parent=1 // pred_check_branch
      %54 = sbr.rel (0) target = $region13
    $region12: #{tpu_custom_call.1} parent=1 // pred_region
      %55 = dma.done [#allocation3], 256
    $region13: #{tpu_custom_call.1} parent=1 // pred_fallthru
      _
    // Predicated region
    $region14: #{tpu_custom_call.1} parent=1 // pred_check
      _
    $region15: #{tpu_custom_call.1} parent=1 // pred_check_branch
      %57 = sbr.rel (0) target = $region17
    $region16: #{tpu_custom_call.1} parent=1 // pred_region
      %58 = dma.done [#allocation6], 256
    $region17: #{tpu_custom_call.1} parent=1 // pred_fallthru
      _
    %s59 = sadd.s32 0, 0
    %p60 = scmp.lt.s32.totalorder %s59, 0
    %s61 = scalar_select %p60, %s59, 0
    %s62 = smul.u32 2, %s61
    %s63 = sadd.s32 0, 0
    %p64 = scmp.lt.s32.totalorder %s63, 0
    %s65 = scalar_select %p64, %s63, 0
    %s66 = smul.u32 2, %s65
    %s67 = sadd.s32 0, 0
    %p68 = scmp.eq.s32.totalorder 0, 0
    // Predicated region
    $region18: #{tpu_custom_call.1} parent=1 // pred_check
      %p69 = pneg %p68
    $region19: #{tpu_custom_call.1} parent=1 // pred_check_branch
      %71 = sbr.rel (%p69) target = $region21
    $region20: #{tpu_custom_call.1} parent=1 // pred_region
      %vm72 = vcmask 261120
      %73 = vst.msk [vmem:[#allocation7] sm:$0xff] %vm72, 0.0
      %74 = vst.msk [vmem:[#allocation7 + $0x8] sm:$0xff] %vm72, 0.0
      %75 = vst.msk [vmem:[#allocation7 + $0x10] sm:$0xff] %vm72, 0.0
      %76 = vst.msk [vmem:[#allocation7 + $0x18] sm:$0xff] %vm72, 0.0
      %vm77 = vcmask 523264
      %78 = vst.msk [vmem:[#allocation8] sm:$0xff] %vm77, 0.0
      %79 = vst.msk [vmem:[#allocation8 + $0x8] sm:$0xff] %vm77, 0.0
      %80 = vst.msk [vmem:[#allocation8 + $0x10] sm:$0xff] %vm77, 0.0
      %81 = vst.msk [vmem:[#allocation8 + $0x18] sm:$0xff] %vm77, 0.0
      %82 = vst.msk [vmem:[#allocation10] sm:$0xff] %vm77, 0.0
      %83 = vst.msk [vmem:[#allocation10 + $0x8] sm:$0xff] %vm77, 0.0
      %84 = vst.msk [vmem:[#allocation10 + $0x10] sm:$0xff] %vm77, 0.0
      %85 = vst.msk [vmem:[#allocation10 + $0x18] sm:$0xff] %vm77, 0.0
      %86 = vst.msk [vmem:[#allocation10 + $0x20] sm:$0xff] %vm77, 0.0
      %87 = vst.msk [vmem:[#allocation10 + $0x28] sm:$0xff] %vm77, 0.0
      %88 = vst.msk [vmem:[#allocation10 + $0x30] sm:$0xff] %vm77, 0.0
      %89 = vst.msk [vmem:[#allocation10 + $0x38] sm:$0xff] %vm77, 0.0
      %vm90 = vcmask 253952
      %91 = vst.msk [vmem:[#allocation11] sm:$0x1] %vm90, 0.0
      %vm92 = vcmask 516096
      %93 = vst.msk [vmem:[#allocation13] sm:$0x1] %vm92, 0.0
    $region21: #{tpu_custom_call.1} parent=1 // pred_fallthru
      _
    %p94 = scmp.lt.s32.totalorder %s67, 1
    // Predicated region
    $region22: #{tpu_custom_call.1} parent=1 // pred_check
      %p95 = pneg %p94
    $region23: #{tpu_custom_call.1} parent=1 // pred_check_branch
      %97 = sbr.rel (%p95) target = $region25
    $region24: #{tpu_custom_call.1} parent=1 // pred_region
      %v98 = vld [vmem:[#allocation2] sm:$0xff]
      %v99 = vld [vmem:[#allocation2 + $0x8] sm:$0xff]
      %v100 = vld [vmem:[#allocation5] sm:$0xff]
      %v101 = vld [vmem:[#allocation5 + $0x8] sm:$0xff]
      %v102 = vld [vmem:[#allocation7] sm:$0xff]
      %v103 = vld [vmem:[#allocation7 + $0x8] sm:$0xff]
      %v104 = vld [vmem:[#allocation7 + $0x10] sm:$0xff]
      %v105 = vld [vmem:[#allocation7 + $0x18] sm:$0xff]
      %106 = vxpose.xlu0.b32.start [1/16] %v98, 128
      %107 = vxpose.xlu0.b32.cont [2/16] %v99, 128
      %108 = vxpose.xlu0.b32.cont [3/16] 0.0, 128
      %109 = vxpose.xlu0.b32.cont [4/16] 0.0, 128
      %110 = vxpose.xlu0.b32.cont [5/16] 0.0, 128
      %111 = vxpose.xlu0.b32.cont [6/16] 0.0, 128
      %112 = vxpose.xlu0.b32.cont [7/16] 0.0, 128
      %113 = vxpose.xlu0.b32.cont [8/16] 0.0, 128
      %114 = vxpose.xlu0.b32.cont [9/16] 0.0, 128
      %115 = vxpose.xlu0.b32.cont [10/16] 0.0, 128
      %116 = vxpose.xlu0.b32.cont [11/16] 0.0, 128
      %117 = vxpose.xlu0.b32.cont [12/16] 0.0, 128
      %118 = vxpose.xlu0.b32.cont [13/16] 0.0, 128
      %119 = vxpose.xlu0.b32.cont [14/16] 0.0, 128
      %120 = vxpose.xlu0.b32.cont [15/16] 0.0, 128
      %121 = vxpose.xlu0.b32.end [16/16] 0.0, 128
      %v122 = vpop.trf.xlu0
      %v123 = vpop.trf.xlu0
      %v124 = vpop.trf.xlu0
      %v125 = vpop.trf.xlu0
      %v126 = vpop.trf.xlu0
      %v127 = vpop.trf.xlu0
      %v128 = vpop.trf.xlu0
      %v129 = vpop.trf.xlu0
      %v130 = vpop.trf.xlu0
      %v131 = vpop.trf.xlu0
      %v132 = vpop.trf.xlu0
      %v133 = vpop.trf.xlu0
      %v134 = vpop.trf.xlu0
      %v135 = vpop.trf.xlu0
      %v136 = vpop.trf.xlu0
      %v137 = vpop.trf.xlu0
      %vm138 = vcmask 130048
      %v140 = vsel %vm138, %v122, 0
      %v143 = vsel %vm138, %v123, 0
      %v146 = vsel %vm138, %v124, 0
      %v149 = vsel %vm138, %v125, 0
      %151 = vmatprep.subr.mxu0 0.0
      %152 = vmatpush1.msra.mxu0 %v98
      %153 = vmatprep.subr.mxu0 0.0
      %154 = vmatpush1.msra.mxu0 %v99
      %155 = vmatprep.subr.mxu0 0.0
      %156 = vmatpush1.msra.mxu0 0.0
      %157 = vmatprep.subr.mxu0 0.0
      %158 = vmatpush1.msra.mxu0 0.0
      %159 = vmatprep.subr.mxu0 0.0
      %160 = vmatpush1.msra.mxu0 0.0
      %161 = vmatprep.subr.mxu0 0.0
      %162 = vmatpush1.msra.mxu0 0.0
      %163 = vmatprep.subr.mxu0 0.0
      %164 = vmatpush1.msra.mxu0 0.0
      %165 = vmatprep.subr.mxu0 0.0
      %166 = vmatpush1.msra.mxu0 0.0
      %167 = vmatprep.subr.mxu0 0.0
      %168 = vmatpush1.msra.mxu0 0.0
      %169 = vmatprep.subr.mxu0 0.0
      %170 = vmatpush1.msra.mxu0 0.0
      %171 = vmatprep.subr.mxu0 0.0
      %172 = vmatpush1.msra.mxu0 0.0
      %173 = vmatprep.subr.mxu0 0.0
      %174 = vmatpush1.msra.mxu0 0.0
      %175 = vmatprep.subr.mxu0 0.0
      %176 = vmatpush1.msra.mxu0 0.0
      %177 = vmatprep.subr.mxu0 0.0
      %178 = vmatpush1.msra.mxu0 0.0
      %179 = vmatprep.subr.mxu0 0.0
      %180 = vmatpush1.msra.mxu0 0.0
      %181 = vmatprep.subr.mxu0 0.0
      %182 = vmatpush1.msra.mxu0 0.0
      %183 = vmatprep.subr.mxu0 0.0
      %184 = vmatpush1.msra.mxu0 0.0
      %185 = vmatprep.subr.mxu0 0.0
      %186 = vmatpush1.msra.mxu0 0.0
      %187 = vmatprep.subr.mxu0 0.0
      %188 = vmatpush1.msra.mxu0 0.0
      %189 = vmatprep.subr.mxu0 0.0
      %190 = vmatpush1.msra.mxu0 0.0
      %191 = vmatprep.subr.mxu0 0.0
      %192 = vmatpush1.msra.mxu0 0.0
      %193 = vmatprep.subr.mxu0 0.0
      %194 = vmatpush1.msra.mxu0 0.0
      %195 = vmatprep.subr.mxu0 0.0
      %196 = vmatpush1.msra.mxu0 0.0
      %197 = vmatprep.subr.mxu0 0.0
      %198 = vmatpush1.msra.mxu0 0.0
      %199 = vmatprep.subr.mxu0 0.0
      %200 = vmatpush1.msra.mxu0 0.0
      %201 = vmatprep.subr.mxu0 0.0
      %202 = vmatpush1.msra.mxu0 0.0
      %203 = vmatprep.subr.mxu0 0.0
      %204 = vmatpush1.msra.mxu0 0.0
      %205 = vmatprep.subr.mxu0 0.0
      %206 = vmatpush1.msra.mxu0 0.0
      %207 = vmatprep.subr.mxu0 0.0
      %208 = vmatpush1.msra.mxu0 0.0
      %209 = vmatprep.subr.mxu0 0.0
      %210 = vmatpush1.msra.mxu0 0.0
      %211 = vmatprep.subr.mxu0 0.0
      %212 = vmatpush1.msra.mxu0 0.0
      %213 = vmatprep.subr.mxu0 0.0
      %214 = vmatpush1.msra.mxu0 0.0
      %215 = vmatprep.mubr.f32.mxu0 0.0
      %216 = vmatmul.mubr.f32.gmra.mrb[0].mxu0 %v140
      %v217 = vpop.f32.mrb[0].mxu0
      %v218 = vadd.f32 0.0, %v217
      %v219 = vpop.f32.mrb[0].mxu0
      %220 = vmatprep.mubr.f32.mxu0 0.0
      %221 = vmatmul.mubr.f32.gmra.mrb[0].mxu0 %v143
      %v222 = vpop.f32.mrb[0].mxu0
      %v223 = vadd.f32 0.0, %v222
      %v224 = vpop.f32.mrb[0].mxu0
      %225 = vmatprep.mubr.f32.mxu0 0.0
      %226 = vmatmul.mubr.f32.gmra.mrb[0].mxu0 %v146
      %v227 = vpop.f32.mrb[0].mxu0
      %v228 = vadd.f32 0.0, %v227
      %v229 = vpop.f32.mrb[0].mxu0
      %230 = vmatprep.mubr.f32.mxu0 0.0
      %231 = vmatmul.mubr.f32.gmra.mrb[0].mxu0 %v149
      %v232 = vpop.f32.mrb[0].mxu0
      %v233 = vadd.f32 0.0, %v232
      %v234 = vpop.f32.mrb[0].mxu0
      %235 = vdwg.mxu0
      %v236 = vadd.f32 %v102, %v218
      %v237 = vadd.f32 %v103, %v223
      %v238 = vadd.f32 %v104, %v228
      %v239 = vadd.f32 %v105, %v233
      %vm240 = vcmask 261120
      %241 = vst.msk [vmem:[#allocation7] sm:$0xff] %vm240, %v236
      %242 = vst.msk [vmem:[#allocation7 + $0x8] sm:$0xff] %vm240, %v237
      %243 = vst.msk [vmem:[#allocation7 + $0x10] sm:$0xff] %vm240, %v238
      %244 = vst.msk [vmem:[#allocation7 + $0x18] sm:$0xff] %vm240, %v239
      %v245 = vld [vmem:[#allocation8] sm:$0xff]
      %v246 = vld [vmem:[#allocation8 + $0x8] sm:$0xff]
      %v247 = vld [vmem:[#allocation8 + $0x10] sm:$0xff]
      %v248 = vld [vmem:[#allocation8 + $0x18] sm:$0xff]
      %249 = vmatprep.subr.mxu0 0.0
      %250 = vmatpush1.msra.mxu0 %v100
      %251 = vmatprep.subr.mxu0 0.0
      %252 = vmatpush1.msra.mxu0 %v101
      %253 = vmatprep.subr.mxu0 0.0
      %254 = vmatpush1.msra.mxu0 0.0
      %255 = vmatprep.subr.mxu0 0.0
      %256 = vmatpush1.msra.mxu0 0.0
      %257 = vmatprep.subr.mxu0 0.0
      %258 = vmatpush1.msra.mxu0 0.0
      %259 = vmatprep.subr.mxu0 0.0
      %260 = vmatpush1.msra.mxu0 0.0
      %261 = vmatprep.subr.mxu0 0.0
      %262 = vmatpush1.msra.mxu0 0.0
      %263 = vmatprep.subr.mxu0 0.0
      %264 = vmatpush1.msra.mxu0 0.0
      %265 = vmatprep.subr.mxu0 0.0
      %266 = vmatpush1.msra.mxu0 0.0
      %267 = vmatprep.subr.mxu0 0.0
      %268 = vmatpush1.msra.mxu0 0.0
      %269 = vmatprep.subr.mxu0 0.0
      %270 = vmatpush1.msra.mxu0 0.0
      %271 = vmatprep.subr.mxu0 0.0
      %272 = vmatpush1.msra.mxu0 0.0
      %273 = vmatprep.subr.mxu0 0.0
      %274 = vmatpush1.msra.mxu0 0.0
      %275 = vmatprep.subr.mxu0 0.0
      %276 = vmatpush1.msra.mxu0 0.0
      %277 = vmatprep.subr.mxu0 0.0
      %278 = vmatpush1.msra.mxu0 0.0
      %279 = vmatprep.subr.mxu0 0.0
      %280 = vmatpush1.msra.mxu0 0.0
      %281 = vmatprep.subr.mxu0 0.0
      %282 = vmatpush1.msra.mxu0 0.0
      %283 = vmatprep.subr.mxu0 0.0
      %284 = vmatpush1.msra.mxu0 0.0
      %285 = vmatprep.subr.mxu0 0.0
      %286 = vmatpush1.msra.mxu0 0.0
      %287 = vmatprep.subr.mxu0 0.0
      %288 = vmatpush1.msra.mxu0 0.0
      %289 = vmatprep.subr.mxu0 0.0
      %290 = vmatpush1.msra.mxu0 0.0
      %291 = vmatprep.subr.mxu0 0.0
      %292 = vmatpush1.msra.mxu0 0.0
      %293 = vmatprep.subr.mxu0 0.0
      %294 = vmatpush1.msra.mxu0 0.0
      %295 = vmatprep.subr.mxu0 0.0
      %296 = vmatpush1.msra.mxu0 0.0
      %297 = vmatprep.subr.mxu0 0.0
      %298 = vmatpush1.msra.mxu0 0.0
      %299 = vmatprep.subr.mxu0 0.0
      %300 = vmatpush1.msra.mxu0 0.0
      %301 = vmatprep.subr.mxu0 0.0
      %302 = vmatpush1.msra.mxu0 0.0
      %303 = vmatprep.subr.mxu0 0.0
      %304 = vmatpush1.msra.mxu0 0.0
      %305 = vmatprep.subr.mxu0 0.0
      %306 = vmatpush1.msra.mxu0 0.0
      %307 = vmatprep.subr.mxu0 0.0
      %308 = vmatpush1.msra.mxu0 0.0
      %309 = vmatprep.subr.mxu0 0.0
      %310 = vmatpush1.msra.mxu0 0.0
      %311 = vmatprep.subr.mxu0 0.0
      %312 = vmatpush1.msra.mxu0 0.0
      %313 = vmatprep.mubr.f32.mxu0 0.0
      %314 = vmatmul.mubr.f32.gmra.mrb[0].mxu0 %v140
      %v315 = vpop.f32.mrb[0].mxu0
      %v316 = vadd.f32 0.0, %v315
      %v317 = vpop.f32.mrb[0].mxu0
      %318 = vmatprep.mubr.f32.mxu0 0.0
      %319 = vmatmul.mubr.f32.gmra.mrb[0].mxu0 %v143
      %v320 = vpop.f32.mrb[0].mxu0
      %v321 = vadd.f32 0.0, %v320
      %v322 = vpop.f32.mrb[0].mxu0
      %323 = vmatprep.mubr.f32.mxu0 0.0
      %324 = vmatmul.mubr.f32.gmra.mrb[0].mxu0 %v146
      %v325 = vpop.f32.mrb[0].mxu0
      %v326 = vadd.f32 0.0, %v325
      %v327 = vpop.f32.mrb[0].mxu0
      %328 = vmatprep.mubr.f32.mxu0 0.0
      %329 = vmatmul.mubr.f32.gmra.mrb[0].mxu0 %v149
      %v330 = vpop.f32.mrb[0].mxu0
      %v331 = vadd.f32 0.0, %v330
      %v332 = vpop.f32.mrb[0].mxu0
      %333 = vdwg.mxu0
      %v334 = vadd.f32 %v245, %v316
      %v335 = vadd.f32 %v246, %v321
      %v336 = vadd.f32 %v247, %v326
      %v337 = vadd.f32 %v248, %v331
      %vm338 = vcmask 523264
      %339 = vst.msk [vmem:[#allocation8] sm:$0xff] %vm338, %v334
      %340 = vst.msk [vmem:[#allocation8 + $0x8] sm:$0xff] %vm338, %v335
      %341 = vst.msk [vmem:[#allocation8 + $0x10] sm:$0xff] %vm338, %v336
      %342 = vst.msk [vmem:[#allocation8 + $0x18] sm:$0xff] %vm338, %v337
      %v343 = vld [vmem:[#allocation10] sm:$0xff]
      %v344 = vld [vmem:[#allocation10 + $0x8] sm:$0xff]
      %v345 = vld [vmem:[#allocation10 + $0x10] sm:$0xff]
      %v346 = vld [vmem:[#allocation10 + $0x18] sm:$0xff]
      %v347 = vld [vmem:[#allocation10 + $0x20] sm:$0xff]
      %v348 = vld [vmem:[#allocation10 + $0x28] sm:$0xff]
      %v349 = vld [vmem:[#allocation10 + $0x30] sm:$0xff]
      %v350 = vld [vmem:[#allocation10 + $0x38] sm:$0xff]
      %351 = vxpose.xlu0.b32.start [1/16] %v100, 128
      %352 = vxpose.xlu0.b32.cont [2/16] %v101, 128
      %353 = vxpose.xlu0.b32.cont [3/16] 0.0, 128
      %354 = vxpose.xlu0.b32.cont [4/16] 0.0, 128
      %355 = vxpose.xlu0.b32.cont [5/16] 0.0, 128
      %356 = vxpose.xlu0.b32.cont [6/16] 0.0, 128
      %357 = vxpose.xlu0.b32.cont [7/16] 0.0, 128
      %358 = vxpose.xlu0.b32.cont [8/16] 0.0, 128
      %359 = vxpose.xlu0.b32.cont [9/16] 0.0, 128
      %360 = vxpose.xlu0.b32.cont [10/16] 0.0, 128
      %361 = vxpose.xlu0.b32.cont [11/16] 0.0, 128
      %362 = vxpose.xlu0.b32.cont [12/16] 0.0, 128
      %363 = vxpose.xlu0.b32.cont [13/16] 0.0, 128
      %364 = vxpose.xlu0.b32.cont [14/16] 0.0, 128
      %365 = vxpose.xlu0.b32.cont [15/16] 0.0, 128
      %366 = vxpose.xlu0.b32.end [16/16] 0.0, 128
      %v367 = vpop.trf.xlu0
      %v368 = vpop.trf.xlu0
      %v369 = vpop.trf.xlu0
      %v370 = vpop.trf.xlu0
      %v371 = vpop.trf.xlu0
      %v372 = vpop.trf.xlu0
      %v373 = vpop.trf.xlu0
      %v374 = vpop.trf.xlu0
      %v375 = vpop.trf.xlu0
      %v376 = vpop.trf.xlu0
      %v377 = vpop.trf.xlu0
      %v378 = vpop.trf.xlu0
      %v379 = vpop.trf.xlu0
      %v380 = vpop.trf.xlu0
      %v381 = vpop.trf.xlu0
      %v382 = vpop.trf.xlu0
      %v384 = vsel %vm138, %v367, 0
      %v387 = vsel %vm138, %v368, 0
      %v390 = vsel %vm138, %v369, 0
      %v393 = vsel %vm138, %v370, 0
      %v396 = vsel %vm138, %v371, 0
      %v399 = vsel %vm138, %v372, 0
      %v402 = vsel %vm138, %v373, 0
      %v405 = vsel %vm138, %v374, 0
      %407 = vmatprep.subr.mxu0 0.0
      %408 = vmatpush1.msra.mxu0 %v100
      %409 = vmatprep.subr.mxu0 0.0
      %410 = vmatpush1.msra.mxu0 %v101
      %411 = vmatprep.subr.mxu0 0.0
      %412 = vmatpush1.msra.mxu0 0.0
      %413 = vmatprep.subr.mxu0 0.0
      %414 = vmatpush1.msra.mxu0 0.0
      %415 = vmatprep.subr.mxu0 0.0
      %416 = vmatpush1.msra.mxu0 0.0
      %417 = vmatprep.subr.mxu0 0.0
      %418 = vmatpush1.msra.mxu0 0.0
      %419 = vmatprep.subr.mxu0 0.0
      %420 = vmatpush1.msra.mxu0 0.0
      %421 = vmatprep.subr.mxu0 0.0
      %422 = vmatpush1.msra.mxu0 0.0
      %423 = vmatprep.subr.mxu0 0.0
      %424 = vmatpush1.msra.mxu0 0.0
      %425 = vmatprep.subr.mxu0 0.0
      %426 = vmatpush1.msra.mxu0 0.0
      %427 = vmatprep.subr.mxu0 0.0
      %428 = vmatpush1.msra.mxu0 0.0
      %429 = vmatprep.subr.mxu0 0.0
      %430 = vmatpush1.msra.mxu0 0.0
      %431 = vmatprep.subr.mxu0 0.0
      %432 = vmatpush1.msra.mxu0 0.0
      %433 = vmatprep.subr.mxu0 0.0
      %434 = vmatpush1.msra.mxu0 0.0
      %435 = vmatprep.subr.mxu0 0.0
      %436 = vmatpush1.msra.mxu0 0.0
      %437 = vmatprep.subr.mxu0 0.0
      %438 = vmatpush1.msra.mxu0 0.0
      %439 = vmatprep.subr.mxu0 0.0
      %440 = vmatpush1.msra.mxu0 0.0
      %441 = vmatprep.subr.mxu0 0.0
      %442 = vmatpush1.msra.mxu0 0.0
      %443 = vmatprep.subr.mxu0 0.0
      %444 = vmatpush1.msra.mxu0 0.0
      %445 = vmatprep.subr.mxu0 0.0
      %446 = vmatpush1.msra.mxu0 0.0
      %447 = vmatprep.subr.mxu0 0.0
      %448 = vmatpush1.msra.mxu0 0.0
      %449 = vmatprep.subr.mxu0 0.0
      %450 = vmatpush1.msra.mxu0 0.0
      %451 = vmatprep.subr.mxu0 0.0
      %452 = vmatpush1.msra.mxu0 0.0
      %453 = vmatprep.subr.mxu0 0.0
      %454 = vmatpush1.msra.mxu0 0.0
      %455 = vmatprep.subr.mxu0 0.0
      %456 = vmatpush1.msra.mxu0 0.0
      %457 = vmatprep.subr.mxu0 0.0
      %458 = vmatpush1.msra.mxu0 0.0
      %459 = vmatprep.subr.mxu0 0.0
      %460 = vmatpush1.msra.mxu0 0.0
      %461 = vmatprep.subr.mxu0 0.0
      %462 = vmatpush1.msra.mxu0 0.0
      %463 = vmatprep.subr.mxu0 0.0
      %464 = vmatpush1.msra.mxu0 0.0
      %465 = vmatprep.subr.mxu0 0.0
      %466 = vmatpush1.msra.mxu0 0.0
      %467 = vmatprep.subr.mxu0 0.0
      %468 = vmatpush1.msra.mxu0 0.0
      %469 = vmatprep.subr.mxu0 0.0
      %470 = vmatpush1.msra.mxu0 0.0
      %471 = vmatprep.mubr.f32.mxu0 0.0
      %472 = vmatmul.mubr.f32.gmra.mrb[0].mxu0 %v384
      %v473 = vpop.f32.mrb[0].mxu0
      %v474 = vadd.f32 0.0, %v473
      %v475 = vpop.f32.mrb[0].mxu0
      %476 = vmatprep.mubr.f32.mxu0 0.0
      %477 = vmatmul.mubr.f32.gmra.mrb[0].mxu0 %v387
      %v478 = vpop.f32.mrb[0].mxu0
      %v479 = vadd.f32 0.0, %v478
      %v480 = vpop.f32.mrb[0].mxu0
      %481 = vmatprep.mubr.f32.mxu0 0.0
      %482 = vmatmul.mubr.f32.gmra.mrb[0].mxu0 %v390
      %v483 = vpop.f32.mrb[0].mxu0
      %v484 = vadd.f32 0.0, %v483
      %v485 = vpop.f32.mrb[0].mxu0
      %486 = vmatprep.mubr.f32.mxu0 0.0
      %487 = vmatmul.mubr.f32.gmra.mrb[0].mxu0 %v393
      %v488 = vpop.f32.mrb[0].mxu0
      %v489 = vadd.f32 0.0, %v488
      %v490 = vpop.f32.mrb[0].mxu0
      %491 = vmatprep.mubr.f32.mxu0 0.0
      %492 = vmatmul.mubr.f32.gmra.mrb[0].mxu0 %v396
      %v493 = vpop.f32.mrb[0].mxu0
      %v494 = vadd.f32 0.0, %v493
      %v495 = vpop.f32.mrb[0].mxu0
      %496 = vmatprep.mubr.f32.mxu0 0.0
      %497 = vmatmul.mubr.f32.gmra.mrb[0].mxu0 %v399
      %v498 = vpop.f32.mrb[0].mxu0
      %v499 = vadd.f32 0.0, %v498
      %v500 = vpop.f32.mrb[0].mxu0
      %501 = vmatprep.mubr.f32.mxu0 0.0
      %502 = vmatmul.mubr.f32.gmra.mrb[0].mxu0 %v402
      %v503 = vpop.f32.mrb[0].mxu0
      %v504 = vadd.f32 0.0, %v503
      %v505 = vpop.f32.mrb[0].mxu0
      %506 = vmatprep.mubr.f32.mxu0 0.0
      %507 = vmatmul.mubr.f32.gmra.mrb[0].mxu0 %v405
      %v508 = vpop.f32.mrb[0].mxu0
      %v509 = vadd.f32 0.0, %v508
      %v510 = vpop.f32.mrb[0].mxu0
      %511 = vdwg.mxu0
      %v512 = vadd.f32 %v343, %v474
      %v513 = vadd.f32 %v344, %v479
      %v514 = vadd.f32 %v345, %v484
      %v515 = vadd.f32 %v346, %v489
      %v516 = vadd.f32 %v347, %v494
      %v517 = vadd.f32 %v348, %v499
      %v518 = vadd.f32 %v349, %v504
      %v519 = vadd.f32 %v350, %v509
      %520 = vst.msk [vmem:[#allocation10] sm:$0xff] %vm338, %v512
      %521 = vst.msk [vmem:[#allocation10 + $0x8] sm:$0xff] %vm338, %v513
      %522 = vst.msk [vmem:[#allocation10 + $0x10] sm:$0xff] %vm338, %v514
      %523 = vst.msk [vmem:[#allocation10 + $0x18] sm:$0xff] %vm338, %v515
      %524 = vst.msk [vmem:[#allocation10 + $0x20] sm:$0xff] %vm338, %v516
      %525 = vst.msk [vmem:[#allocation10 + $0x28] sm:$0xff] %vm338, %v517
      %526 = vst.msk [vmem:[#allocation10 + $0x30] sm:$0xff] %vm338, %v518
      %527 = vst.msk [vmem:[#allocation10 + $0x38] sm:$0xff] %vm338, %v519
      %v528 = vld [vmem:[#allocation11] sm:$0x1]
      %v529 = vsel %vm240, %v98, 0.0
      %v530 = vsel %vm240, %v99, 0.0
      %v531 = vadd.f32 %v529, %v530
      %v532 = vrot.slane %v531, 4
      %v533 = vadd.f32 %v531, %v532
      %v534 = vrot.slane %v533, 2
      %v535 = vadd.f32 %v533, %v534
      %v536 = vrot.slane %v535, 1
      %v537 = vadd.f32 %v535, %v536
      %v538 = vadd.f32 %v528, %v537
      %vm539 = vcmask 253952
      %540 = vst.msk [vmem:[#allocation11] sm:$0x1] %vm539, %v538
      %v541 = vld [vmem:[#allocation13] sm:$0x1]
      %v542 = vsel %vm338, %v100, 0.0
      %v543 = vsel %vm338, %v101, 0.0
      %v544 = vadd.f32 %v542, %v543
      %v545 = vrot.slane %v544, 4
      %v546 = vadd.f32 %v544, %v545
      %v547 = vrot.slane %v546, 2
      %v548 = vadd.f32 %v546, %v547
      %v549 = vrot.slane %v548, 1
      %v550 = vadd.f32 %v548, %v549
      %v551 = vadd.f32 %v541, %v550
      %vm552 = vcmask 516096
      %553 = vst.msk [vmem:[#allocation13] sm:$0x1] %vm552, %v551
    $region25: #{tpu_custom_call.1} parent=1 // pred_fallthru
      _
    // Predicated region
    $region26: #{tpu_custom_call.1} parent=1 // pred_check
      _
    $region27: #{tpu_custom_call.1} parent=1 // pred_check_branch
      %555 = sbr.rel (0) target = $region29
    $region28: #{tpu_custom_call.1} parent=1 // pred_region
      %s557 = ssub.s32 512, 512
      %558 = vsyncadd [#allocation4], %s557
      %s559 = sshll.u32 [#allocation7], 4
      %s560 = int_to_ptr.vmem [resolvable:$true] %s559
      %565 = dma.vmem_to_hbm [thread:$0]  %s560, 512, %s2, [#allocation4], 128, 128, 8
    $region29: #{tpu_custom_call.1} parent=1 // pred_fallthru
      _
    // Predicated region
    $region30: #{tpu_custom_call.1} parent=1 // pred_check
      _
    $region31: #{tpu_custom_call.1} parent=1 // pred_check_branch
      %567 = sbr.rel (0) target = $region33
    $region32: #{tpu_custom_call.1} parent=1 // pred_region
      %s569 = ssub.s32 512, 512
      %570 = vsyncadd [#allocation9], %s569
      %s571 = sshll.u32 [#allocation8], 4
      %s572 = int_to_ptr.vmem [resolvable:$true] %s571
      %577 = dma.vmem_to_hbm [thread:$0]  %s572, 512, %s3, [#allocation9], 128, 128, 8
    $region33: #{tpu_custom_call.1} parent=1 // pred_fallthru
      _
    // Predicated region
    $region34: #{tpu_custom_call.1} parent=1 // pred_check
      _
    $region35: #{tpu_custom_call.1} parent=1 // pred_check_branch
      %579 = sbr.rel (0) target = $region37
    $region36: #{tpu_custom_call.1} parent=1 // pred_region
      %s581 = ssub.s32 1024, 1024
      %582 = vsyncadd [#allocation9], %s581
      %s583 = sshll.u32 [#allocation10], 4
      %s584 = int_to_ptr.vmem [resolvable:$true] %s583
      %589 = dma.vmem_to_hbm [thread:$0]  %s584, 1024, %s4, [#allocation9], 128, 128, 8
    $region37: #{tpu_custom_call.1} parent=1 // pred_fallthru
      _
    // Predicated region
    $region38: #{tpu_custom_call.1} parent=1 // pred_check
      _
    $region39: #{tpu_custom_call.1} parent=1 // pred_check_branch
      %591 = sbr.rel (0) target = $region41
    $region40: #{tpu_custom_call.1} parent=1 // pred_region
      %s593 = ssub.s32 16, 16
      %594 = vsyncadd [#allocation12], %s593
      %s596 = sshll.u32 [#allocation11], 4
      %s597 = int_to_ptr.vmem [resolvable:$true] %s596
      %599 = dma.vmem_to_hbm [thread:$0]  %s597, 16, %s5, [#allocation12]
    $region41: #{tpu_custom_call.1} parent=1 // pred_fallthru
      _
    // Predicated region
    $region42: #{tpu_custom_call.1} parent=1 // pred_check
      _
    $region43: #{tpu_custom_call.1} parent=1 // pred_check_branch
      %601 = sbr.rel (0) target = $region45
    $region44: #{tpu_custom_call.1} parent=1 // pred_region
      %s603 = ssub.s32 16, 16
      %604 = vsyncadd [#allocation12], %s603
      %s606 = sshll.u32 [#allocation13], 4
      %s607 = int_to_ptr.vmem [resolvable:$true] %s606
      %609 = dma.vmem_to_hbm [thread:$0]  %s607, 16, %s6, [#allocation12]
    $region45: #{tpu_custom_call.1} parent=1 // pred_fallthru
      _
    // Predicated region
    $region46: #{tpu_custom_call.1} parent=1 // pred_check
      _
    $region47: #{tpu_custom_call.1} parent=1 // pred_check_branch
      %611 = sbr.rel (0) target = $region49
    $region48: #{tpu_custom_call.1} parent=1 // pred_region
      %612 = dma.done [#allocation4], 512
    $region49: #{tpu_custom_call.1} parent=1 // pred_fallthru
      _
    // Predicated region
    $region50: #{tpu_custom_call.1} parent=1 // pred_check
      _
    $region51: #{tpu_custom_call.1} parent=1 // pred_check_branch
      %614 = sbr.rel (0) target = $region53
    $region52: #{tpu_custom_call.1} parent=1 // pred_region
      %615 = dma.done [#allocation9], 512
    $region53: #{tpu_custom_call.1} parent=1 // pred_fallthru
      _
    // Predicated region
    $region54: #{tpu_custom_call.1} parent=1 // pred_check
      _
    $region55: #{tpu_custom_call.1} parent=1 // pred_check_branch
      %617 = sbr.rel (0) target = $region57
    $region56: #{tpu_custom_call.1} parent=1 // pred_region
      %618 = dma.done [#allocation9], 1024
    $region57: #{tpu_custom_call.1} parent=1 // pred_fallthru
      _
    // Predicated region
    $region58: #{tpu_custom_call.1} parent=1 // pred_check
      _
    $region59: #{tpu_custom_call.1} parent=1 // pred_check_branch
      %620 = sbr.rel (0) target = $region61
    $region60: #{tpu_custom_call.1} parent=1 // pred_region
      %621 = dma.done [#allocation12], 16
    $region61: #{tpu_custom_call.1} parent=1 // pred_fallthru
      _
    // Predicated region
    $region62: #{tpu_custom_call.1} parent=1 // pred_check
      _
    $region63: #{tpu_custom_call.1} parent=1 // pred_check_branch
      %623 = sbr.rel (0) target = $region65
    $region64: #{tpu_custom_call.1} parent=1 // pred_region
      %624 = dma.done [#allocation12], 16
    $region65: #{tpu_custom_call.1} parent=1 // pred_fallthru
      _
    %625 = vsyncpa [#allocation3], 1
    %626 = vsyncpa [#allocation6], 1
    %627 = vsyncpa [#allocation4], 1
    %628 = vsyncpa [#allocation9], 1
    %629 = vsyncpa [#allocation12], 1

</llo_original>
